<compile_context>
chip_gen: v6e
topology: v6e:2x2x1
jax: 0.10.0
libtpu: 0.0.40
codegen_flags: <defaults>
</compile_context>

<pallas_src>
import functools

import jax
import jax.numpy as jnp
from jax.experimental import pallas as pl
from jax.experimental.pallas import tpu as pltpu


# -----------------------------------------------------------------------------
# forward(): parameter read-out.  No Pallas kernel on purpose (perf review #1).
# -----------------------------------------------------------------------------
def attacker_forward(position: jax.Array) -> jax.Array:
    """Attacker.forward(): returns the current position parameter (f32[2])."""
    return jnp.asarray(position, dtype=jnp.float32)


# -----------------------------------------------------------------------------
# Fused APO attack-step kernel: Adam update + clamp to [-3, 3], in place.
# -----------------------------------------------------------------------------
def apo_attack_update_kernel(hp_ref, grad_ref, pos_ref, m_ref, v_ref,
                             new_pos_ref, new_m_ref, new_v_ref):
    # hp (SMEM f32[8]): [lr, b1, 1-b1, b2, 1-b2, eps, 1/(1-b1^t), 1/(1-b2^t)]
    lr = hp_ref[0]
    b1 = hp_ref[1]
    omb1 = hp_ref[2]
    b2 = hp_ref[3]
    omb2 = hp_ref[4]
    eps = hp_ref[5]
    bc1 = hp_ref[6]
    bc2 = hp_ref[7]

    g = grad_ref[...]
    m = b1 * m_ref[...] + omb1 * g
    v = b2 * v_ref[...] + omb2 * (g * g)

    m_hat = m * bc1
    v_hat = v * bc2
    pos = pos_ref[...] - lr * m_hat / (jnp.sqrt(v_hat) + eps)
    pos = jnp.clip(pos, -3.0, 3.0)  # torch.clamp(self.position.data, -3, 3)

    new_pos_ref[...] = pos
    new_m_ref[...] = m
    new_v_ref[...] = v


@functools.partial(jax.jit, donate_argnums=(2, 3, 4))
def _attack_update_call(hp, grad2d, pos2d, m2d, v2d):
    vmem = pl.BlockSpec(memory_space=pltpu.VMEM)  # full-array block, no grid
    return pl.pallas_call(
        apo_attack_update_kernel,
        out_shape=(
            jax.ShapeDtypeStruct((1, 2), jnp.float32),
            jax.ShapeDtypeStruct((1, 2), jnp.float32),
            jax.ShapeDtypeStruct((1, 2), jnp.float32),
        ),
        in_specs=[
            pl.BlockSpec(memory_space=pltpu.SMEM),  # hyperparams (scalars)
            vmem,                                   # grad
            vmem,                                   # position
            vmem,                                   # m (Adam 1st moment)
            vmem,                                   # v (Adam 2nd moment)
        ],
        out_specs=(vmem, vmem, vmem),
        # In-place update of position / m / v (perf review #2).
        input_output_aliases={2: 0, 3: 1, 4: 2},
    )(hp, grad2d, pos2d, m2d, v2d)


def attacker_attack_step(position, m, v, grad, step, *,
                         lr=0.1, beta1=0.9, beta2=0.999, eps=1e-8):
    """One fused attack step: Adam(lr) update on `position` + clamp to [-3,3]."""
    step = int(step)
    bc1 = 1.0 / (1.0 - beta1 ** step)
    bc2 = 1.0 / (1.0 - beta2 ** step)
    hp = jnp.array([lr, beta1, 1.0 - beta1, beta2, 1.0 - beta2, eps, bc1, bc2],
                   dtype=jnp.float32)

    pos2d = jnp.asarray(position, jnp.float32).reshape(1, 2)
    m2d = jnp.asarray(m, jnp.float32).reshape(1, 2)
    v2d = jnp.asarray(v, jnp.float32).reshape(1, 2)
    grad2d = jnp.asarray(grad, jnp.float32).reshape(1, 2)

    new_pos, new_m, new_v = _attack_update_call(hp, grad2d, pos2d, m2d, v2d)
    return new_pos.reshape(2), new_m.reshape(2), new_v.reshape(2)


if __name__ == "__main__":
    key = jax.random.PRNGKey(0)
    k_w, k_b = jax.random.split(key)

    # Stand-in for the external detector module: a tiny logistic detector
    # giving a detection probability for a 2-D position.
    # TODO(synk): the real Detector is an external nn.Module; its forward /
    # backward stays in JAX autodiff rather than inside the Pallas kernel.
    w = jax.random.normal(k_w, (2,), dtype=jnp.float32)
    b = jax.random.normal(k_b, (), dtype=jnp.float32)

    def detector_prob(p):
        return jax.nn.sigmoid(jnp.dot(w, p) + b)

    # Attacker parameter / Adam state, matching the PyTorch init (zeros).
    position = jnp.zeros((2,), dtype=jnp.float32)
    m_state = jnp.zeros((2,), dtype=jnp.float32)
    v_state = jnp.zeros((2,), dtype=jnp.float32)
    lr = 0.1
    step = 1

    # forward(): pure parameter read-out (exact semantics of the module).
    fwd = attacker_forward(position)
    assert fwd.shape == (2,) and fwd.dtype == jnp.float32
    assert bool(jnp.all(fwd == position))

    # attack_loss.backward(): grad of detection prob w.r.t. position.
    grad = jax.grad(detector_prob)(position)

    # Pure-JAX reference of the fused Adam + clamp update.
    def reference(pos, m, v, g, t):
        b1, b2, e = 0.9, 0.999, 1e-8
        m_new = b1 * m + (1.0 - b1) * g
        v_new = b2 * v + (1.0 - b2) * g * g
        m_hat = m_new / (1.0 - b1 ** t)
        v_hat = v_new / (1.0 - b2 ** t)
        pos_new = jnp.clip(pos - lr * m_hat / (jnp.sqrt(v_hat) + e), -3.0, 3.0)
        return pos_new, m_new, v_new

    ref_pos, ref_m, ref_v = reference(position, m_state, v_state, grad, step)

    new_pos, new_m, new_v = attacker_attack_step(
        position, m_state, v_state, grad, step, lr=lr)
    new_pos, new_m, new_v = jax.block_until_ready((new_pos, new_m, new_v))

    assert new_pos.shape == (2,) and new_pos.dtype == jnp.float32
    assert jnp.allclose(new_pos, ref_pos, rtol=1e-5, atol=1e-6), (new_pos, ref_pos)
    assert jnp.allclose(new_m, ref_m, rtol=1e-5, atol=1e-6), (new_m, ref_m)
    assert jnp.allclose(new_v, ref_v, rtol=1e-5, atol=1e-6), (new_v, ref_v)

    # forward() after the step still just returns the (updated) parameter.
    fwd2 = attacker_forward(new_pos)
    assert fwd2.shape == (2,) and bool(jnp.all(fwd2 == new_pos))

    print("KERNEL_OK")
</pallas_src>

<mosaic_0001>
module attributes {stable_mosaic.version = 11 : i64} {
  func.func @apo_attack_update_kernel(%arg0: memref<8xf32, #tpu.memory_space<smem>>, %arg1: memref<1x2xf32, #tpu.memory_space<vmem>>, %arg2: memref<1x2xf32, #tpu.memory_space<vmem>>, %arg3: memref<1x2xf32, #tpu.memory_space<vmem>>, %arg4: memref<1x2xf32, #tpu.memory_space<vmem>>, %arg5: memref<1x2xf32, #tpu.memory_space<vmem>>, %arg6: memref<1x2xf32, #tpu.memory_space<vmem>>, %arg7: memref<1x2xf32, #tpu.memory_space<vmem>>) attributes {dimension_semantics = [], scalar_prefetch = 0 : i64, scratch_operands = 0 : i64, tpu.core_type = #tpu.core_type<tc>} {
    %c0 = arith.constant 0 : index
    %0 = memref.load %arg0[%c0] : memref<8xf32, #tpu.memory_space<smem>>
    %c1 = arith.constant 1 : index
    %1 = memref.load %arg0[%c1] : memref<8xf32, #tpu.memory_space<smem>>
    %c2 = arith.constant 2 : index
    %2 = memref.load %arg0[%c2] : memref<8xf32, #tpu.memory_space<smem>>
    %c3 = arith.constant 3 : index
    %3 = memref.load %arg0[%c3] : memref<8xf32, #tpu.memory_space<smem>>
    %c4 = arith.constant 4 : index
    %4 = memref.load %arg0[%c4] : memref<8xf32, #tpu.memory_space<smem>>
    %c5 = arith.constant 5 : index
    %5 = memref.load %arg0[%c5] : memref<8xf32, #tpu.memory_space<smem>>
    %c6 = arith.constant 6 : index
    %6 = memref.load %arg0[%c6] : memref<8xf32, #tpu.memory_space<smem>>
    %c7 = arith.constant 7 : index
    %7 = memref.load %arg0[%c7] : memref<8xf32, #tpu.memory_space<smem>>
    %c0_0 = arith.constant 0 : index
    %c0_1 = arith.constant 0 : index
    %8 = vector.load %arg1[%c0_0, %c0_1] : memref<1x2xf32, #tpu.memory_space<vmem>>, vector<1x2xf32>
    %c0_2 = arith.constant 0 : index
    %c0_3 = arith.constant 0 : index
    %9 = vector.load %arg3[%c0_2, %c0_3] : memref<1x2xf32, #tpu.memory_space<vmem>>, vector<1x2xf32>
    %10 = vector.broadcast %1 : f32 to vector<1x2xf32>
    %11 = arith.mulf %10, %9 : vector<1x2xf32>
    %12 = vector.broadcast %2 : f32 to vector<1x2xf32>
    %13 = arith.mulf %12, %8 : vector<1x2xf32>
    %14 = arith.addf %11, %13 : vector<1x2xf32>
    %c0_4 = arith.constant 0 : index
    %c0_5 = arith.constant 0 : index
    %15 = vector.load %arg4[%c0_4, %c0_5] : memref<1x2xf32, #tpu.memory_space<vmem>>, vector<1x2xf32>
    %16 = vector.broadcast %3 : f32 to vector<1x2xf32>
    %17 = arith.mulf %16, %15 : vector<1x2xf32>
    %18 = arith.mulf %8, %8 : vector<1x2xf32>
    %19 = vector.broadcast %4 : f32 to vector<1x2xf32>
    %20 = arith.mulf %19, %18 : vector<1x2xf32>
    %21 = arith.addf %17, %20 : vector<1x2xf32>
    %22 = vector.broadcast %6 : f32 to vector<1x2xf32>
    %23 = arith.mulf %14, %22 : vector<1x2xf32>
    %24 = vector.broadcast %7 : f32 to vector<1x2xf32>
    %25 = arith.mulf %21, %24 : vector<1x2xf32>
    %c0_6 = arith.constant 0 : index
    %c0_7 = arith.constant 0 : index
    %26 = vector.load %arg2[%c0_6, %c0_7] : memref<1x2xf32, #tpu.memory_space<vmem>>, vector<1x2xf32>
    %27 = vector.broadcast %0 : f32 to vector<1x2xf32>
    %28 = arith.mulf %27, %23 : vector<1x2xf32>
    %29 = math.sqrt %25 : vector<1x2xf32>
    %30 = vector.broadcast %5 : f32 to vector<1x2xf32>
    %31 = arith.addf %29, %30 : vector<1x2xf32>
    %32 = arith.divf %28, %31 : vector<1x2xf32>
    %33 = arith.subf %26, %32 : vector<1x2xf32>
    %cst = arith.constant -3.000000e+00 : f32
    %cst_8 = arith.constant 3.000000e+00 : f32
    %34 = vector.broadcast %cst : f32 to vector<1x2xf32>
    %35 = arith.maximumf %34, %33 : vector<1x2xf32>
    %36 = vector.broadcast %cst_8 : f32 to vector<1x2xf32>
    %37 = arith.minimumf %36, %35 : vector<1x2xf32>
    %c0_9 = arith.constant 0 : index
    %c0_10 = arith.constant 0 : index
    %38 = vector.load %arg5[%c0_9, %c0_10] : memref<1x2xf32, #tpu.memory_space<vmem>>, vector<1x2xf32>
    tpu.vector_store %arg5[%c0_9, %c0_10], %37 {strides = array<i32>} : memref<1x2xf32, #tpu.memory_space<vmem>>, vector<1x2xf32>,
    %c0_11 = arith.constant 0 : index
    %c0_12 = arith.constant 0 : index
    %39 = vector.load %arg6[%c0_11, %c0_12] : memref<1x2xf32, #tpu.memory_space<vmem>>, vector<1x2xf32>
    tpu.vector_store %arg6[%c0_11, %c0_12], %14 {strides = array<i32>} : memref<1x2xf32, #tpu.memory_space<vmem>>, vector<1x2xf32>,
    %c0_13 = arith.constant 0 : index
    %c0_14 = arith.constant 0 : index
    %40 = vector.load %arg7[%c0_13, %c0_14] : memref<1x2xf32, #tpu.memory_space<vmem>>, vector<1x2xf32>
    tpu.vector_store %arg7[%c0_13, %c0_14], %21 {strides = array<i32>} : memref<1x2xf32, #tpu.memory_space<vmem>>, vector<1x2xf32>,
    return
  }
}

</mosaic_0001>

<llo_original>
// kernel: _attack_update_call.1
$region0: #{_attack_update_call.1}
  #allocation0 [shape = 'u32[]', space=smem, size = 0x4, offset = 0x4, fixed_abs, tag = 'smem constant byte address 0x4 - core index']
  #allocation1 [shape = 'u32[144,128]{1,0:T(1,128)}', space=vmem, size = 0x12000, scoped, tag = 'internal scratch']
  %s0 = inlined_call_operand.hbm [shape: f32[8], index: 0, kind: input, shape index: {}]
  %s1 = inlined_call_operand.vmem [shape: f32[1,2], index: 1, kind: input, shape index: {}]
  %s2 = inlined_call_operand.hbm [shape: f32[1,2], index: 2, kind: input, shape index: {}, may-alias: {2,5}]
  %s3 = inlined_call_operand.hbm [shape: f32[1,2], index: 3, kind: input, shape index: {}, may-alias: {3,6}]
  %s4 = inlined_call_operand.hbm [shape: f32[1,2], index: 4, kind: input, shape index: {}, may-alias: {4,7}]
  %s5 = inlined_call_operand.hbm [shape: f32[1,2], index: 5, kind: output, shape index: {0}, may-alias: {2,5}]
  %s6 = inlined_call_operand.hbm [shape: f32[1,2], index: 6, kind: output, shape index: {1}, may-alias: {3,6}]
  %s7 = inlined_call_operand.hbm [shape: f32[1,2], index: 7, kind: output, shape index: {2}, may-alias: {4,7}]
  %8 = xla_tuple %s5, %s6, %s7
  %s9 = sld [smem:[#allocation0]]
  $region62: #{_attack_update_call.1} parent=0
    _
  %s11 = ssub.s32 1, %s9
  %s12 = scalar_select 0, %s11, %s9
  $region1: #{_attack_update_call.1} parent=0
    #allocation2 [shape = 'u8[512]{0}', space=smem, size = 0x200, scoped, tag = 'input window, operand 0, single buffered']
    #allocation3 [shape = 's32[1]{0}', space=sflag, size = 0x4, scoped, tag = 'scoped memory for _attack_update_call.1']
    #allocation4 [shape = 's32[1]{0}', space=sflag, size = 0x4, scoped, tag = 'scoped memory for _attack_update_call.1']
    #allocation5 [shape = 's32[1]{0}', space=sflag, size = 0x4, scoped, tag = 'scoped memory for _attack_update_call.1']
    #allocation6 [shape = 'u8[512]{0}', space=vmem, size = 0x400, scoped, tag = 'input window, operand 2, single buffered']
    #allocation7 [shape = 'u8[512]{0}', space=vmem, size = 0x400, scoped, tag = 'input window, operand 3, single buffered']
    #allocation8 [shape = 's32[1]{0}', space=sflag, size = 0x4, scoped, tag = 'scoped memory for _attack_update_call.1']
    #allocation9 [shape = 'u8[512]{0}', space=vmem, size = 0x400, scoped, tag = 'input window, operand 4, single buffered']
    #allocation10 [shape = 'u8[512]{0}', space=vmem, size = 0x400, scoped, tag = 'output window, operand 0, single buffered']
    #allocation11 [shape = 'u8[512]{0}', space=vmem, size = 0x400, scoped, tag = 'output window, operand 1, single buffered']
    #allocation12 [shape = 's32[1]{0}', space=sflag, size = 0x4, scoped, tag = 'scoped memory for _attack_update_call.1']
    #allocation13 [shape = 'u8[512]{0}', space=vmem, size = 0x400, scoped, tag = 'output window, operand 2, single buffered']
    %13 = vsyncpa [#allocation5], 0
    %14 = vsyncpa [#allocation3], 0
    %15 = vsyncpa [#allocation8], 0
    %16 = vsyncpa [#allocation4], 0
    %17 = vsyncpa [#allocation12], 0
    // Predicated region
    $region2: #{_attack_update_call.1} parent=1 // pred_check
      _
    $region3: #{_attack_update_call.1} parent=1 // pred_check_branch
      %19 = sbr.rel (0) target = $region5
    $region4: #{_attack_update_call.1} parent=1 // pred_region
      %s21 = ssub.s32 16, 16
      %22 = vsyncadd [#allocation5], %s21
      %25 = dma.hbm_to_smem %s0, 16, [#allocation2], [#allocation5]
    $region5: #{_attack_update_call.1} parent=1 // pred_fallthru
      _
    // Predicated region
    $region6: #{_attack_update_call.1} parent=1 // pred_check
      _
    $region7: #{_attack_update_call.1} parent=1 // pred_check_branch
      %27 = sbr.rel (0) target = $region9
    $region8: #{_attack_update_call.1} parent=1 // pred_region
      _
    $region9: #{_attack_update_call.1} parent=1 // pred_fallthru
      _
    // Predicated region
    $region10: #{_attack_update_call.1} parent=1 // pred_check
      _
    $region11: #{_attack_update_call.1} parent=1 // pred_check_branch
      %29 = sbr.rel (0) target = $region13
    $region12: #{_attack_update_call.1} parent=1 // pred_region
      %s31 = ssub.s32 16, 16
      %32 = vsyncadd [#allocation3], %s31
      %s34 = sshll.u32 [#allocation6], 4
      %s35 = int_to_ptr.vmem [resolvable:$true] %s34
      %37 = dma.hbm_to_vmem [thread:$0]  %s2, 16, %s35, [#allocation3]
    $region13: #{_attack_update_call.1} parent=1 // pred_fallthru
      _
    // Predicated region
    $region14: #{_attack_update_call.1} parent=1 // pred_check
      _
    $region15: #{_attack_update_call.1} parent=1 // pred_check_branch
      %39 = sbr.rel (0) target = $region17
    $region16: #{_attack_update_call.1} parent=1 // pred_region
      %s41 = ssub.s32 16, 16
      %42 = vsyncadd [#allocation8], %s41
      %s44 = sshll.u32 [#allocation7], 4
      %s45 = int_to_ptr.vmem [resolvable:$true] %s44
      %47 = dma.hbm_to_vmem [thread:$0]  %s3, 16, %s45, [#allocation8]
    $region17: #{_attack_update_call.1} parent=1 // pred_fallthru
      _
    // Predicated region
    $region18: #{_attack_update_call.1} parent=1 // pred_check
      _
    $region19: #{_attack_update_call.1} parent=1 // pred_check_branch
      %49 = sbr.rel (0) target = $region21
    $region20: #{_attack_update_call.1} parent=1 // pred_region
      %s51 = ssub.s32 16, 16
      %52 = vsyncadd [#allocation8], %s51
      %s54 = sshll.u32 [#allocation9], 4
      %s55 = int_to_ptr.vmem [resolvable:$true] %s54
      %57 = dma.hbm_to_vmem [thread:$0]  %s4, 16, %s55, [#allocation8]
    $region21: #{_attack_update_call.1} parent=1 // pred_fallthru
      _
    // Predicated region
    $region22: #{_attack_update_call.1} parent=1 // pred_check
      _
    $region23: #{_attack_update_call.1} parent=1 // pred_check_branch
      %59 = sbr.rel (0) target = $region25
    $region24: #{_attack_update_call.1} parent=1 // pred_region
      %60 = dma.done [#allocation5], 16
    $region25: #{_attack_update_call.1} parent=1 // pred_fallthru
      _
    // Predicated region
    $region26: #{_attack_update_call.1} parent=1 // pred_check
      _
    $region27: #{_attack_update_call.1} parent=1 // pred_check_branch
      %62 = sbr.rel (0) target = $region29
    $region28: #{_attack_update_call.1} parent=1 // pred_region
      %63 = dma.done [#allocation3], 16
    $region29: #{_attack_update_call.1} parent=1 // pred_fallthru
      _
    // Predicated region
    $region30: #{_attack_update_call.1} parent=1 // pred_check
      _
    $region31: #{_attack_update_call.1} parent=1 // pred_check_branch
      %65 = sbr.rel (0) target = $region33
    $region32: #{_attack_update_call.1} parent=1 // pred_region
      %66 = dma.done [#allocation8], 16
    $region33: #{_attack_update_call.1} parent=1 // pred_fallthru
      _
    // Predicated region
    $region34: #{_attack_update_call.1} parent=1 // pred_check
      _
    $region35: #{_attack_update_call.1} parent=1 // pred_check_branch
      %68 = sbr.rel (0) target = $region37
    $region36: #{_attack_update_call.1} parent=1 // pred_region
      %69 = dma.done [#allocation8], 16
    $region37: #{_attack_update_call.1} parent=1 // pred_fallthru
      _
    %70 = sfence
    %s71 = sld [smem:[#allocation2]]
    %s72 = sld [smem:[#allocation2 + $0x1]]
    %s73 = sld [smem:[#allocation2 + $0x2]]
    %s74 = sld [smem:[#allocation2 + $0x3]]
    %s75 = sld [smem:[#allocation2 + $0x4]]
    %s76 = sld [smem:[#allocation2 + $0x5]]
    %s77 = sld [smem:[#allocation2 + $0x6]]
    %s78 = sld [smem:[#allocation2 + $0x7]]
    %v79 = vld [vmem:[%s1] sm:$0x1]
    %v80 = vld [vmem:[#allocation7] sm:$0x1]
    %v81 = vstv %s72
    %v82 = vmul.f32 %v81, %v80
    %v83 = vstv %s73
    %v84 = vmul.f32 %v83, %v79
    %v85 = vadd.f32 %v82, %v84
    %v86 = vld [vmem:[#allocation9] sm:$0x1]
    %v87 = vstv %s74
    %v88 = vmul.f32 %v87, %v86
    %v89 = vmul.f32 %v79, %v79
    %v90 = vstv %s75
    %v91 = vmul.f32 %v90, %v89
    %v92 = vadd.f32 %v88, %v91
    %v93 = vstv %s77
    %v94 = vmul.f32 %v85, %v93
    %v95 = vstv %s78
    %v96 = vmul.f32 %v92, %v95
    %v97 = vld [vmem:[#allocation6] sm:$0x1]
    %v98 = vstv %s71
    %v99 = vmul.f32 %v98, %v94
    %v100 = vrsqrt.pop %v96
    %v101 = vmul.f32 %v96, %v100
    %vm102 = vcmp.eq.f32.partialorder %v96, inf
    %v103 = vsel %vm102, %v96, %v101
    %vm104 = vcmp.eq.f32.partialorder %v96, 0.0
    %v105 = vand.u32 %v96, 2147483648
    %v106 = vsel %vm104, %v105, %v103
    %v107 = vstv %s76
    %v108 = vadd.f32 %v106, %v107
    %v109 = vrcp.pop %v108
    %v110 = vmul.f32 %v99, %v109
    %v111 = vsub.f32 %v97, %v110
    %v112 = vmax.f32 %v111, -3.0
    %v113 = vmin.f32 %v112, 3.0
    %vm114 = vcmask 8192
    %115 = vst.msk [vmem:[#allocation10] sm:$0x1] %vm114, %v113
    %116 = vst.msk [vmem:[#allocation11] sm:$0x1] %vm114, %v85
    %117 = vst.msk [vmem:[#allocation13] sm:$0x1] %vm114, %v92
    // Predicated region
    $region38: #{_attack_update_call.1} parent=1 // pred_check
      _
    $region39: #{_attack_update_call.1} parent=1 // pred_check_branch
      %119 = sbr.rel (0) target = $region41
    $region40: #{_attack_update_call.1} parent=1 // pred_region
      %s121 = ssub.s32 16, 16
      %122 = vsyncadd [#allocation4], %s121
      %s124 = sshll.u32 [#allocation10], 4
      %s125 = int_to_ptr.vmem [resolvable:$true] %s124
      %127 = dma.vmem_to_hbm [thread:$0]  %s125, 16, %s5, [#allocation4]
    $region41: #{_attack_update_call.1} parent=1 // pred_fallthru
      _
    // Predicated region
    $region42: #{_attack_update_call.1} parent=1 // pred_check
      _
    $region43: #{_attack_update_call.1} parent=1 // pred_check_branch
      %129 = sbr.rel (0) target = $region45
    $region44: #{_attack_update_call.1} parent=1 // pred_region
      %s131 = ssub.s32 16, 16
      %132 = vsyncadd [#allocation12], %s131
      %s134 = sshll.u32 [#allocation11], 4
      %s135 = int_to_ptr.vmem [resolvable:$true] %s134
      %137 = dma.vmem_to_hbm [thread:$0]  %s135, 16, %s6, [#allocation12]
    $region45: #{_attack_update_call.1} parent=1 // pred_fallthru
      _
    // Predicated region
    $region46: #{_attack_update_call.1} parent=1 // pred_check
      _
    $region47: #{_attack_update_call.1} parent=1 // pred_check_branch
      %139 = sbr.rel (0) target = $region49
    $region48: #{_attack_update_call.1} parent=1 // pred_region
      %s141 = ssub.s32 16, 16
      %142 = vsyncadd [#allocation12], %s141
      %s144 = sshll.u32 [#allocation13], 4
      %s145 = int_to_ptr.vmem [resolvable:$true] %s144
      %147 = dma.vmem_to_hbm [thread:$0]  %s145, 16, %s7, [#allocation12]
    $region49: #{_attack_update_call.1} parent=1 // pred_fallthru
      _
    // Predicated region
    $region50: #{_attack_update_call.1} parent=1 // pred_check
      _
    $region51: #{_attack_update_call.1} parent=1 // pred_check_branch
      %149 = sbr.rel (0) target = $region53
    $region52: #{_attack_update_call.1} parent=1 // pred_region
      %150 = dma.done [#allocation4], 16
    $region53: #{_attack_update_call.1} parent=1 // pred_fallthru
      _
    // Predicated region
    $region54: #{_attack_update_call.1} parent=1 // pred_check
      _
    $region55: #{_attack_update_call.1} parent=1 // pred_check_branch
      %152 = sbr.rel (0) target = $region57
    $region56: #{_attack_update_call.1} parent=1 // pred_region
      %153 = dma.done [#allocation12], 16
    $region57: #{_attack_update_call.1} parent=1 // pred_fallthru
      _
    // Predicated region
    $region58: #{_attack_update_call.1} parent=1 // pred_check
      _
    $region59: #{_attack_update_call.1} parent=1 // pred_check_branch
      %155 = sbr.rel (0) target = $region61
    $region60: #{_attack_update_call.1} parent=1 // pred_region
      %156 = dma.done [#allocation12], 16
    $region61: #{_attack_update_call.1} parent=1 // pred_fallthru
      _
    %157 = vsyncpa [#allocation3], 1
    %158 = vsyncpa [#allocation8], 1
    %159 = vsyncpa [#allocation4], 1
    %160 = vsyncpa [#allocation12], 1
    %161 = vsyncpa [#allocation5], 1

</llo_original>
